<compile_context>
chip_gen: v7x
topology: tpu7x:2x2x1
jax: 0.10.0
libtpu: 0.0.40
codegen_flags: <defaults>
</compile_context>

<pallas_src>
import numpy as np
import jax
import jax.numpy as jnp
from jax import lax
from jax.experimental import pallas as pl
from jax.experimental.pallas import tpu as pltpu

_LANE = 128  # pad hidden dim to a full lane width -> dense vregs, unmasked vst/vld


# --------------------------------------------------------------------------- #
# Kernel
# --------------------------------------------------------------------------- #
def _task_reduction_kernel(mask_ref, count_ref, x_ref, wex_ref, bex_ref,
                           ws_ref, wo_ref, s0_ref, out_ref):
    n = x_ref.shape[0]

    # ---- Prologue: ONE fused batched MXU dispatch ---------------------------
    #   xproj[i] = x[i] @ (W_e @ W_x) + (b_e @ W_x + b_r)
    # (embedding folded into the recurrence's input projection; exact algebra,
    #  tanh is applied afterwards).  [N, F] @ [F, DP] -> one vreg tile, kept
    # in registers for the whole recurrence (no VMEM scratch round trip).
    xproj = jnp.dot(x_ref[...], wex_ref[...],
                    preferred_element_type=jnp.float32) + bex_ref[...]

    # Hoist loop-invariant W_s into vregs once.
    ws = ws_ref[...]

    # ---- Serial recurrence, state carried in vregs --------------------------
    # Fully unrolled static loop; each step is guarded by a scalar SMEM
    # predicate so masked-out examples skip the matmul + tanh entirely
    # (the serial chain runs `count` steps of real work, not N).
    def _make_step(xrow):
        def _step(s):
            return jnp.tanh(
                jnp.dot(s, ws, preferred_element_type=jnp.float32) + xrow)
        return _step

    state = s0_ref[...]
    for i in range(n):
        xrow = xproj[i:i + 1, :]              # static sublane slice (in-vreg)
        state = lax.cond(mask_ref[i] > 0, _make_step(xrow), lambda s: s, state)

    # ---- Readout ONCE after the loop ----------------------------------------
    readout = jnp.sum(state * wo_ref[...])
    # Reference semantics: result stays 0 if no example was selected (guards
    # the general case of a non-zero initState()).
    gate = jnp.where(count_ref[0] > 0, 1.0, 0.0)
    out_ref[...] = jnp.reshape(readout * gate, (1, 1))


def _run_kernel(mask, count, x_flat, W_ex, b_ex, W_s, w_o, s0):
    vmem = pl.BlockSpec(memory_space=pltpu.MemorySpace.VMEM)
    smem = pl.BlockSpec(memory_space=pltpu.MemorySpace.SMEM)
    # Single invocation, whole-array specs: total footprint < 0.5 MiB, the
    # kernel is latency-bound on the serial recurrence -> no grid, no tiling,
    # default scoped-VMEM limits are ample on v5e/v6e/v7x.
    return pl.pallas_call(
        _task_reduction_kernel,
        out_shape=jax.ShapeDtypeStruct((1, 1), jnp.float32),
        in_specs=[smem, smem] + [vmem] * 6,
        out_specs=vmem,
    )(mask, count, x_flat, W_ex, b_ex, W_s, w_o, s0)


@jax.jit
def _forward(mask, count, x_flat, W_ex, b_ex, W_s, w_o, s0):
    """Jitted hot path: just the Pallas call + scalar extraction."""
    out = _run_kernel(mask, count, x_flat, W_ex, b_ex, W_s, w_o, s0)
    return out[0, 0]


# --------------------------------------------------------------------------- #
# One-time parameter preparation (fusion + lane padding, OFF the hot path)
# --------------------------------------------------------------------------- #
def prepare_params(params):
    """Fold W_e@W_x / b_e@W_x+b_r and zero-pad the hidden dim to 128 lanes.

    Call once when the parameters are created; the padding/fusion is exact:
    padded xproj/state columns stay 0 (tanh(0)=0) and the w_o padding is 0,
    so the readout is unchanged.
    """
    W_e, b_e, W_s, W_x, b_r, w_o, s0 = [jnp.asarray(p, jnp.float32) for p in params]
    D = W_e.shape[1]
    DP = max(_LANE, pl.cdiv(D, _LANE) * _LANE)
    pad = DP - D

    W_ex = W_e @ W_x                 # [F, D]
    b_ex = b_e @ W_x + b_r           # [1, D]

    W_ex = jnp.pad(W_ex, ((0, 0), (0, pad)))
    b_ex = jnp.pad(b_ex, ((0, 0), (0, pad)))
    W_s = jnp.pad(W_s, ((0, pad), (0, pad)))
    w_o = jnp.pad(w_o, ((0, 0), (0, pad)))
    s0 = jnp.pad(s0, ((0, 0), (0, pad)))
    return (W_ex, b_ex, W_s, w_o, s0)


# --------------------------------------------------------------------------- #
# Forward pass (host glue + kernel)
# --------------------------------------------------------------------------- #
def stateful_task_reduction(inputs, labels, prepared_params):
    """Forward pass of StatefulTaskReduction. Returns float32 [num_labels].

    `labels` is expected as a host (numpy) array: the unique-label enumeration
    has a data-dependent output shape (num_labels), so it must run host-side.
    """
    W_ex, b_ex, W_s, w_o, s0 = prepared_params

    labels_np = np.asarray(labels)[:, 0, 0]
    unique = []
    for l in labels_np.tolist():
        if l not in unique:
            unique.append(l)
    num_labels = len(unique)
    # Faithful to the reference indentation: only the LAST unique label's
    # mask is consumed; only result[num_labels - 1] is written.
    mask_np = labels_np == unique[-1]
    mask = jnp.asarray(mask_np.astype(np.int32))
    count = jnp.asarray(np.array([int(mask_np.sum())], dtype=np.int32))

    N = inputs.shape[0]
    x_flat = jnp.asarray(inputs, jnp.float32).reshape(N, -1)  # NCHW -> [N, C*H*W]

    scalar = _forward(mask, count, x_flat, W_ex, b_ex, W_s, w_o, s0)
    result = jnp.zeros((num_labels,), jnp.float32).at[num_labels - 1].set(scalar)
    return result


# --------------------------------------------------------------------------- #
# Pure-numpy reference (unfused, unpadded) for verification
# --------------------------------------------------------------------------- #
def _reference(inputs, labels, params):
    W_e, b_e, W_s, W_x, b_r, w_o, s0 = [np.asarray(p, np.float32) for p in params]
    labels_np = np.asarray(labels)[:, 0, 0]
    unique = []
    for l in labels_np.tolist():
        if l not in unique:
            unique.append(l)
    mask = labels_np == unique[-1]
    x = np.asarray(inputs, np.float32).reshape(inputs.shape[0], -1)
    rep = x @ W_e + b_e
    sel = rep[mask]
    state = s0.copy()
    out = 0.0
    for row in sel:
        state = np.tanh(state @ W_s + row[None, :] @ W_x + b_r)
        out = float(np.sum(state * w_o))
    res = np.zeros(len(unique), np.float32)
    res[-1] = out
    return res


if __name__ == "__main__":
    # Small shapes: N=8 support examples, NCHW inputs [8, 4, 8, 8], hidden D=32.
    N, C, H, W = 8, 4, 8, 8
    F = C * H * W
    D = 32

    key = jax.random.PRNGKey(0)
    k_in, k_we, k_be, k_ws, k_wx, k_br, k_wo = jax.random.split(key, 7)

    inputs = jax.random.normal(k_in, (N, C, H, W), jnp.float32)
    labels = np.array([0, 0, 1, 1, 2, 2, 1, 0], np.int32).reshape(N, 1, 1)

    W_e = jax.random.normal(k_we, (F, D), jnp.float32) * (1.0 / np.sqrt(F))
    b_e = jax.random.normal(k_be, (1, D), jnp.float32) * 0.01
    W_s = jax.random.normal(k_ws, (D, D), jnp.float32) * (1.0 / np.sqrt(D))
    W_x = jax.random.normal(k_wx, (D, D), jnp.float32) * (1.0 / np.sqrt(D))
    b_r = jax.random.normal(k_br, (1, D), jnp.float32) * 0.01
    w_o = jax.random.normal(k_wo, (1, D), jnp.float32) * (1.0 / np.sqrt(D))
    s0 = jnp.zeros((1, D), jnp.float32)

    raw_params = (W_e, b_e, W_s, W_x, b_r, w_o, s0)
    prepared = prepare_params(raw_params)   # one-time fusion + padding

    out = stateful_task_reduction(inputs, labels, prepared)
    out = jax.block_until_ready(out)

    ref = _reference(inputs, labels, raw_params)
    assert out.shape == ref.shape, (out.shape, ref.shape)
    assert np.allclose(np.asarray(out), ref, rtol=2e-3, atol=2e-3), (out, ref)

    print("KERNEL_OK")
</pallas_src>

<mosaic_0001>
module attributes {stable_mosaic.version = 11 : i64} {
  func.func @_task_reduction_kernel(%arg0: memref<8xi32, #tpu.memory_space<smem>>, %arg1: memref<1xi32, #tpu.memory_space<smem>>, %arg2: memref<8x256xf32, #tpu.memory_space<vmem>>, %arg3: memref<256x128xf32, #tpu.memory_space<vmem>>, %arg4: memref<1x128xf32, #tpu.memory_space<vmem>>, %arg5: memref<128x128xf32, #tpu.memory_space<vmem>>, %arg6: memref<1x128xf32, #tpu.memory_space<vmem>>, %arg7: memref<1x128xf32, #tpu.memory_space<vmem>>, %arg8: memref<1x1xf32, #tpu.memory_space<vmem>>) attributes {dimension_semantics = [], scalar_prefetch = 0 : i64, scratch_operands = 0 : i64, tpu.core_type = #tpu.core_type<tc>} {
    %c0 = arith.constant 0 : index
    %c0_0 = arith.constant 0 : index
    %0 = vector.load %arg2[%c0, %c0_0] : memref<8x256xf32, #tpu.memory_space<vmem>>, vector<8x256xf32>
    %c0_1 = arith.constant 0 : index
    %c0_2 = arith.constant 0 : index
    %1 = vector.load %arg3[%c0_1, %c0_2] : memref<256x128xf32, #tpu.memory_space<vmem>>, vector<256x128xf32>
    %cst = arith.constant dense<0.000000e+00> : vector<8x128xf32>
    %2 = tpu.matmul %0, %1, %cst {dimension_numbers = #tpu.dot_dimension_numbers<[1], [0], [0], [1], [0, 0, 1, 1], [], []>} : vector<8x256xf32>, vector<256x128xf32>, vector<8x128xf32> -> vector<8x128xf32>
    %c0_3 = arith.constant 0 : index
    %c0_4 = arith.constant 0 : index
    %3 = vector.load %arg4[%c0_3, %c0_4] : memref<1x128xf32, #tpu.memory_space<vmem>>, vector<1x128xf32>
    %4 = vector.broadcast %3 : vector<1x128xf32> to vector<8x128xf32>
    %5 = arith.addf %2, %4 : vector<8x128xf32>
    %c0_5 = arith.constant 0 : index
    %c0_6 = arith.constant 0 : index
    %6 = vector.load %arg5[%c0_5, %c0_6] : memref<128x128xf32, #tpu.memory_space<vmem>>, vector<128x128xf32>
    %c0_7 = arith.constant 0 : index
    %c0_8 = arith.constant 0 : index
    %7 = vector.load %arg7[%c0_7, %c0_8] : memref<1x128xf32, #tpu.memory_space<vmem>>, vector<1x128xf32>
    %8 = vector.extract_strided_slice %5 {offsets = [0, 0], sizes = [1, 128], strides = [1, 1]} : vector<8x128xf32> to vector<1x128xf32>
    %c0_9 = arith.constant 0 : index
    %9 = memref.load %arg0[%c0_9] : memref<8xi32, #tpu.memory_space<smem>>
    %c0_i32 = arith.constant 0 : i32
    %10 = arith.cmpi sgt, %9, %c0_i32 : i32
    %11 = arith.extui %10 : i1 to i32
    %c0_i32_10 = arith.constant 0 : i32
    %12 = arith.cmpi ne, %11, %c0_i32_10 : i32
    %13 = scf.if %12 -> (vector<1x128xf32>) {
      %cst_34 = arith.constant dense<0.000000e+00> : vector<1x128xf32>
      %68 = tpu.matmul %7, %6, %cst_34 {dimension_numbers = #tpu.dot_dimension_numbers<[1], [0], [0], [1], [0, 0, 1, 1], [], []>} : vector<1x128xf32>, vector<128x128xf32>, vector<1x128xf32> -> vector<1x128xf32>
      %69 = arith.addf %68, %8 : vector<1x128xf32>
      %70 = math.tanh %69 : vector<1x128xf32>
      scf.yield %70 : vector<1x128xf32>
    } else {
      scf.yield %7 : vector<1x128xf32>
    }
    %14 = vector.extract_strided_slice %5 {offsets = [1, 0], sizes = [1, 128], strides = [1, 1]} : vector<8x128xf32> to vector<1x128xf32>
    %c1 = arith.constant 1 : index
    %15 = memref.load %arg0[%c1] : memref<8xi32, #tpu.memory_space<smem>>
    %c0_i32_11 = arith.constant 0 : i32
    %16 = arith.cmpi sgt, %15, %c0_i32_11 : i32
    %17 = arith.extui %16 : i1 to i32
    %c0_i32_12 = arith.constant 0 : i32
    %18 = arith.cmpi ne, %17, %c0_i32_12 : i32
    %19 = scf.if %18 -> (vector<1x128xf32>) {
      %cst_34 = arith.constant dense<0.000000e+00> : vector<1x128xf32>
      %68 = tpu.matmul %13, %6, %cst_34 {dimension_numbers = #tpu.dot_dimension_numbers<[1], [0], [0], [1], [0, 0, 1, 1], [], []>} : vector<1x128xf32>, vector<128x128xf32>, vector<1x128xf32> -> vector<1x128xf32>
      %69 = arith.addf %68, %14 : vector<1x128xf32>
      %70 = math.tanh %69 : vector<1x128xf32>
      scf.yield %70 : vector<1x128xf32>
    } else {
      scf.yield %13 : vector<1x128xf32>
    }
    %20 = vector.extract_strided_slice %5 {offsets = [2, 0], sizes = [1, 128], strides = [1, 1]} : vector<8x128xf32> to vector<1x128xf32>
    %c2 = arith.constant 2 : index
    %21 = memref.load %arg0[%c2] : memref<8xi32, #tpu.memory_space<smem>>
    %c0_i32_13 = arith.constant 0 : i32
    %22 = arith.cmpi sgt, %21, %c0_i32_13 : i32
    %23 = arith.extui %22 : i1 to i32
    %c0_i32_14 = arith.constant 0 : i32
    %24 = arith.cmpi ne, %23, %c0_i32_14 : i32
    %25 = scf.if %24 -> (vector<1x128xf32>) {
      %cst_34 = arith.constant dense<0.000000e+00> : vector<1x128xf32>
      %68 = tpu.matmul %19, %6, %cst_34 {dimension_numbers = #tpu.dot_dimension_numbers<[1], [0], [0], [1], [0, 0, 1, 1], [], []>} : vector<1x128xf32>, vector<128x128xf32>, vector<1x128xf32> -> vector<1x128xf32>
      %69 = arith.addf %68, %20 : vector<1x128xf32>
      %70 = math.tanh %69 : vector<1x128xf32>
      scf.yield %70 : vector<1x128xf32>
    } else {
      scf.yield %19 : vector<1x128xf32>
    }
    %26 = vector.extract_strided_slice %5 {offsets = [3, 0], sizes = [1, 128], strides = [1, 1]} : vector<8x128xf32> to vector<1x128xf32>
    %c3 = arith.constant 3 : index
    %27 = memref.load %arg0[%c3] : memref<8xi32, #tpu.memory_space<smem>>
    %c0_i32_15 = arith.constant 0 : i32
    %28 = arith.cmpi sgt, %27, %c0_i32_15 : i32
    %29 = arith.extui %28 : i1 to i32
    %c0_i32_16 = arith.constant 0 : i32
    %30 = arith.cmpi ne, %29, %c0_i32_16 : i32
    %31 = scf.if %30 -> (vector<1x128xf32>) {
      %cst_34 = arith.constant dense<0.000000e+00> : vector<1x128xf32>
      %68 = tpu.matmul %25, %6, %cst_34 {dimension_numbers = #tpu.dot_dimension_numbers<[1], [0], [0], [1], [0, 0, 1, 1], [], []>} : vector<1x128xf32>, vector<128x128xf32>, vector<1x128xf32> -> vector<1x128xf32>
      %69 = arith.addf %68, %26 : vector<1x128xf32>
      %70 = math.tanh %69 : vector<1x128xf32>
      scf.yield %70 : vector<1x128xf32>
    } else {
      scf.yield %25 : vector<1x128xf32>
    }
    %32 = vector.extract_strided_slice %5 {offsets = [4, 0], sizes = [1, 128], strides = [1, 1]} : vector<8x128xf32> to vector<1x128xf32>
    %c4 = arith.constant 4 : index
    %33 = memref.load %arg0[%c4] : memref<8xi32, #tpu.memory_space<smem>>
    %c0_i32_17 = arith.constant 0 : i32
    %34 = arith.cmpi sgt, %33, %c0_i32_17 : i32
    %35 = arith.extui %34 : i1 to i32
    %c0_i32_18 = arith.constant 0 : i32
    %36 = arith.cmpi ne, %35, %c0_i32_18 : i32
    %37 = scf.if %36 -> (vector<1x128xf32>) {
      %cst_34 = arith.constant dense<0.000000e+00> : vector<1x128xf32>
      %68 = tpu.matmul %31, %6, %cst_34 {dimension_numbers = #tpu.dot_dimension_numbers<[1], [0], [0], [1], [0, 0, 1, 1], [], []>} : vector<1x128xf32>, vector<128x128xf32>, vector<1x128xf32> -> vector<1x128xf32>
      %69 = arith.addf %68, %32 : vector<1x128xf32>
      %70 = math.tanh %69 : vector<1x128xf32>
      scf.yield %70 : vector<1x128xf32>
    } else {
      scf.yield %31 : vector<1x128xf32>
    }
    %38 = vector.extract_strided_slice %5 {offsets = [5, 0], sizes = [1, 128], strides = [1, 1]} : vector<8x128xf32> to vector<1x128xf32>
    %c5 = arith.constant 5 : index
    %39 = memref.load %arg0[%c5] : memref<8xi32, #tpu.memory_space<smem>>
    %c0_i32_19 = arith.constant 0 : i32
    %40 = arith.cmpi sgt, %39, %c0_i32_19 : i32
    %41 = arith.extui %40 : i1 to i32
    %c0_i32_20 = arith.constant 0 : i32
    %42 = arith.cmpi ne, %41, %c0_i32_20 : i32
    %43 = scf.if %42 -> (vector<1x128xf32>) {
      %cst_34 = arith.constant dense<0.000000e+00> : vector<1x128xf32>
      %68 = tpu.matmul %37, %6, %cst_34 {dimension_numbers = #tpu.dot_dimension_numbers<[1], [0], [0], [1], [0, 0, 1, 1], [], []>} : vector<1x128xf32>, vector<128x128xf32>, vector<1x128xf32> -> vector<1x128xf32>
      %69 = arith.addf %68, %38 : vector<1x128xf32>
      %70 = math.tanh %69 : vector<1x128xf32>
      scf.yield %70 : vector<1x128xf32>
    } else {
      scf.yield %37 : vector<1x128xf32>
    }
    %44 = vector.extract_strided_slice %5 {offsets = [6, 0], sizes = [1, 128], strides = [1, 1]} : vector<8x128xf32> to vector<1x128xf32>
    %c6 = arith.constant 6 : index
    %45 = memref.load %arg0[%c6] : memref<8xi32, #tpu.memory_space<smem>>
    %c0_i32_21 = arith.constant 0 : i32
    %46 = arith.cmpi sgt, %45, %c0_i32_21 : i32
    %47 = arith.extui %46 : i1 to i32
    %c0_i32_22 = arith.constant 0 : i32
    %48 = arith.cmpi ne, %47, %c0_i32_22 : i32
    %49 = scf.if %48 -> (vector<1x128xf32>) {
      %cst_34 = arith.constant dense<0.000000e+00> : vector<1x128xf32>
      %68 = tpu.matmul %43, %6, %cst_34 {dimension_numbers = #tpu.dot_dimension_numbers<[1], [0], [0], [1], [0, 0, 1, 1], [], []>} : vector<1x128xf32>, vector<128x128xf32>, vector<1x128xf32> -> vector<1x128xf32>
      %69 = arith.addf %68, %44 : vector<1x128xf32>
      %70 = math.tanh %69 : vector<1x128xf32>
      scf.yield %70 : vector<1x128xf32>
    } else {
      scf.yield %43 : vector<1x128xf32>
    }
    %50 = vector.extract_strided_slice %5 {offsets = [7, 0], sizes = [1, 128], strides = [1, 1]} : vector<8x128xf32> to vector<1x128xf32>
    %c7 = arith.constant 7 : index
    %51 = memref.load %arg0[%c7] : memref<8xi32, #tpu.memory_space<smem>>
    %c0_i32_23 = arith.constant 0 : i32
    %52 = arith.cmpi sgt, %51, %c0_i32_23 : i32
    %53 = arith.extui %52 : i1 to i32
    %c0_i32_24 = arith.constant 0 : i32
    %54 = arith.cmpi ne, %53, %c0_i32_24 : i32
    %55 = scf.if %54 -> (vector<1x128xf32>) {
      %cst_34 = arith.constant dense<0.000000e+00> : vector<1x128xf32>
      %68 = tpu.matmul %49, %6, %cst_34 {dimension_numbers = #tpu.dot_dimension_numbers<[1], [0], [0], [1], [0, 0, 1, 1], [], []>} : vector<1x128xf32>, vector<128x128xf32>, vector<1x128xf32> -> vector<1x128xf32>
      %69 = arith.addf %68, %50 : vector<1x128xf32>
      %70 = math.tanh %69 : vector<1x128xf32>
      scf.yield %70 : vector<1x128xf32>
    } else {
      scf.yield %49 : vector<1x128xf32>
    }
    %c0_25 = arith.constant 0 : index
    %c0_26 = arith.constant 0 : index
    %56 = vector.load %arg6[%c0_25, %c0_26] : memref<1x128xf32, #tpu.memory_space<vmem>>, vector<1x128xf32>
    %57 = arith.mulf %55, %56 : vector<1x128xf32>
    %58 = vector.shape_cast %57 : vector<1x128xf32> to vector<1x1x128xf32>
    %cst_27 = arith.constant dense<0.000000e+00> : vector<1xf32>
    %59 = vector.multi_reduction <add>, %58, %cst_27 [1, 2] : vector<1x1x128xf32> to vector<1xf32>
    %60 = vector.shape_cast %59 : vector<1xf32> to vector<1x1x1xf32>
    %61 = vector.extract %60[0, 0, 0] : f32 from vector<1x1x1xf32>
    %c0_28 = arith.constant 0 : index
    %62 = memref.load %arg1[%c0_28] : memref<1xi32, #tpu.memory_space<smem>>
    %c0_i32_29 = arith.constant 0 : i32
    %63 = arith.cmpi sgt, %62, %c0_i32_29 : i32
    %cst_30 = arith.constant 1.000000e+00 : f32
    %cst_31 = arith.constant 0.000000e+00 : f32
    %64 = arith.select %63, %cst_30, %cst_31 : f32
    %65 = arith.mulf %61, %64 : f32
    %66 = vector.broadcast %65 : f32 to vector<1x1xf32>
    %c0_32 = arith.constant 0 : index
    %c0_33 = arith.constant 0 : index
    %67 = vector.load %arg8[%c0_32, %c0_33] : memref<1x1xf32, #tpu.memory_space<vmem>>, vector<1x1xf32>
    tpu.vector_store %arg8[%c0_32, %c0_33], %66 {strides = array<i32>} : memref<1x1xf32, #tpu.memory_space<vmem>>, vector<1x1xf32>,
    return
  }
}

</mosaic_0001>

<llo_original>
// kernel: _forward.1
$region0: #{_forward.1}
  #allocation0 [shape = 'u32[]', space=smem, size = 0x4, offset = 0x4, fixed_abs, tag = 'smem constant byte address 0x4 - core index']
  #allocation1 [shape = 'u32[144,128]{1,0:T(1,128)}', space=vmem, size = 0x12000, scoped, tag = 'internal scratch']
  #allocation2 [shape = 's32[1]{0:T(128)S(6)}', space=smem, size = 0x200, scoped, tag = 'scoped memory for _forward.1']
  %s0 = inlined_call_operand.vmem [shape: s32[8], index: 0, kind: input, shape index: {}]
  %s1 = inlined_call_operand.<no memory space> [shape: s32[1], index: 1, kind: input, shape index: {}]
  %s2 = inlined_call_operand.hbm [shape: f32[8,256], index: 2, kind: input, shape index: {}]
  %s3 = inlined_call_operand.hbm [shape: f32[256,128], index: 3, kind: input, shape index: {}]
  %s4 = inlined_call_operand.vmem [shape: f32[1,128], index: 4, kind: input, shape index: {}]
  %s5 = inlined_call_operand.hbm [shape: f32[128,128], index: 5, kind: input, shape index: {}]
  %s6 = inlined_call_operand.vmem [shape: f32[1,128], index: 6, kind: input, shape index: {}]
  %s7 = inlined_call_operand.vmem [shape: f32[1,128], index: 7, kind: input, shape index: {}]
  %s8 = inlined_call_operand.hbm [shape: f32[1,1], index: 8, kind: output, shape index: {}]
  %s9 = sld [smem:[#allocation0]]
  $region122: #{_forward.1} parent=0
    _
  %s11 = ssub.s32 1, %s9
  %s12 = scalar_select 0, %s11, %s9
  %13 = sst [smem:[#allocation2]] %s1
  $region1: #{_forward.1} parent=0
    #allocation3 [shape = 'u8[512]{0}', space=smem, size = 0x200, scoped, tag = 'input window, operand 0, single buffered']
    #allocation4 [shape = 's32[1]{0}', space=sflag, size = 0x4, scoped, tag = 'scoped memory for _forward.1']
    #allocation5 [shape = 's32[1]{0}', space=sflag, size = 0x4, scoped, tag = 'scoped memory for _forward.1']
    #allocation6 [shape = 's32[1]{0}', space=sflag, size = 0x4, scoped, tag = 'scoped memory for _forward.1']
    #allocation7 [shape = 'u8[8192]{0}', space=vmem, size = 0x2000, scoped, tag = 'input window, operand 2, single buffered']
    #allocation8 [shape = 'u8[131072]{0}', space=vmem, size = 0x20000, scoped, tag = 'input window, operand 3, single buffered']
    #allocation9 [shape = 's32[1]{0}', space=sflag, size = 0x4, scoped, tag = 'scoped memory for _forward.1']
    #allocation10 [shape = 'u8[65536]{0}', space=vmem, size = 0x10000, scoped, tag = 'input window, operand 5, single buffered']
    #allocation11 [shape = 'u8[512]{0}', space=vmem, size = 0x400, scoped, tag = 'output window, operand 0, single buffered']
    %14 = vsyncpa [#allocation6], 0
    %15 = vsyncpa [#allocation4], 0
    %16 = vsyncpa [#allocation9], 0
    %17 = vsyncpa [#allocation5], 0
    // Predicated region
    $region2: #{_forward.1} parent=1 // pred_check
      _
    $region3: #{_forward.1} parent=1 // pred_check_branch
      %19 = sbr.rel (0) target = $region5
    $region4: #{_forward.1} parent=1 // pred_region
      %s21 = ssub.s32 16, 16
      %22 = vsyncadd [#allocation6], %s21
      %s24 = sshll.u32 %s0, 4
      %s25 = int_to_ptr.vmem [resolvable:$true] %s24
      %27 = dma.vmem_to_smem %s25, 16, [#allocation3], [#allocation6]
    $region5: #{_forward.1} parent=1 // pred_fallthru
      _
    // Predicated region
    $region6: #{_forward.1} parent=1 // pred_check
      _
    $region7: #{_forward.1} parent=1 // pred_check_branch
      %29 = sbr.rel (0) target = $region9
    $region8: #{_forward.1} parent=1 // pred_region
      _
    $region9: #{_forward.1} parent=1 // pred_fallthru
      _
    // Predicated region
    $region10: #{_forward.1} parent=1 // pred_check
      _
    $region11: #{_forward.1} parent=1 // pred_check_branch
      %31 = sbr.rel (0) target = $region13
    $region12: #{_forward.1} parent=1 // pred_region
      %s33 = ssub.s32 256, 256
      %34 = vsyncadd [#allocation4], %s33
      %s36 = sshll.u32 [#allocation7], 4
      %s37 = int_to_ptr.vmem [resolvable:$true] %s36
      %39 = dma.hbm_to_vmem [thread:$0]  %s2, 256, %s37, [#allocation4]
    $region13: #{_forward.1} parent=1 // pred_fallthru
      _
    // Predicated region
    $region14: #{_forward.1} parent=1 // pred_check
      _
    $region15: #{_forward.1} parent=1 // pred_check_branch
      %41 = sbr.rel (0) target = $region17
    $region16: #{_forward.1} parent=1 // pred_region
      %s43 = ssub.s32 4096, 4096
      %44 = vsyncadd [#allocation9], %s43
      %s45 = sshll.u32 [#allocation8], 4
      %s46 = int_to_ptr.vmem [resolvable:$true] %s45
      %51 = dma.hbm_to_vmem [thread:$0]  %s3, 4096, %s46, [#allocation9], 128, 128, 8
    $region17: #{_forward.1} parent=1 // pred_fallthru
      _
    // Predicated region
    $region18: #{_forward.1} parent=1 // pred_check
      _
    $region19: #{_forward.1} parent=1 // pred_check_branch
      %53 = sbr.rel (0) target = $region21
    $region20: #{_forward.1} parent=1 // pred_region
      _
    $region21: #{_forward.1} parent=1 // pred_fallthru
      _
    // Predicated region
    $region22: #{_forward.1} parent=1 // pred_check
      _
    $region23: #{_forward.1} parent=1 // pred_check_branch
      %55 = sbr.rel (0) target = $region25
    $region24: #{_forward.1} parent=1 // pred_region
      %s57 = ssub.s32 2048, 2048
      %58 = vsyncadd [#allocation9], %s57
      %s59 = sshll.u32 [#allocation10], 4
      %s60 = int_to_ptr.vmem [resolvable:$true] %s59
      %65 = dma.hbm_to_vmem [thread:$0]  %s5, 2048, %s60, [#allocation9], 128, 128, 8
    $region25: #{_forward.1} parent=1 // pred_fallthru
      _
    // Predicated region
    $region26: #{_forward.1} parent=1 // pred_check
      _
    $region27: #{_forward.1} parent=1 // pred_check_branch
      %67 = sbr.rel (0) target = $region29
    $region28: #{_forward.1} parent=1 // pred_region
      _
    $region29: #{_forward.1} parent=1 // pred_fallthru
      _
    // Predicated region
    $region30: #{_forward.1} parent=1 // pred_check
      _
    $region31: #{_forward.1} parent=1 // pred_check_branch
      %69 = sbr.rel (0) target = $region33
    $region32: #{_forward.1} parent=1 // pred_region
      _
    $region33: #{_forward.1} parent=1 // pred_fallthru
      _
    // Predicated region
    $region34: #{_forward.1} parent=1 // pred_check
      _
    $region35: #{_forward.1} parent=1 // pred_check_branch
      %71 = sbr.rel (0) target = $region37
    $region36: #{_forward.1} parent=1 // pred_region
      %72 = dma.done [#allocation6], 16
    $region37: #{_forward.1} parent=1 // pred_fallthru
      _
    // Predicated region
    $region38: #{_forward.1} parent=1 // pred_check
      _
    $region39: #{_forward.1} parent=1 // pred_check_branch
      %74 = sbr.rel (0) target = $region41
    $region40: #{_forward.1} parent=1 // pred_region
      %75 = dma.done [#allocation4], 256
    $region41: #{_forward.1} parent=1 // pred_fallthru
      _
    // Predicated region
    $region42: #{_forward.1} parent=1 // pred_check
      _
    $region43: #{_forward.1} parent=1 // pred_check_branch
      %77 = sbr.rel (0) target = $region45
    $region44: #{_forward.1} parent=1 // pred_region
      %78 = dma.done [#allocation9], 4096
    $region45: #{_forward.1} parent=1 // pred_fallthru
      _
    // Predicated region
    $region46: #{_forward.1} parent=1 // pred_check
      _
    $region47: #{_forward.1} parent=1 // pred_check_branch
      %80 = sbr.rel (0) target = $region49
    $region48: #{_forward.1} parent=1 // pred_region
      %81 = dma.done [#allocation9], 2048
    $region49: #{_forward.1} parent=1 // pred_fallthru
      _
    %82 = sfence
    %v83 = vld [vmem:[#allocation7] sm:$0xff]
    %v84 = vld [vmem:[#allocation7 + $0x8] sm:$0xff]
    %v85 = vld [vmem:[#allocation8] sm:$0xff]
    %v86 = vld [vmem:[#allocation8 + $0x8] sm:$0xff]
    %v87 = vld [vmem:[#allocation8 + $0x10] sm:$0xff]
    %v88 = vld [vmem:[#allocation8 + $0x18] sm:$0xff]
    %v89 = vld [vmem:[#allocation8 + $0x20] sm:$0xff]
    %v90 = vld [vmem:[#allocation8 + $0x28] sm:$0xff]
    %v91 = vld [vmem:[#allocation8 + $0x30] sm:$0xff]
    %v92 = vld [vmem:[#allocation8 + $0x38] sm:$0xff]
    %v93 = vld [vmem:[#allocation8 + $0x40] sm:$0xff]
    %v94 = vld [vmem:[#allocation8 + $0x48] sm:$0xff]
    %v95 = vld [vmem:[#allocation8 + $0x50] sm:$0xff]
    %v96 = vld [vmem:[#allocation8 + $0x58] sm:$0xff]
    %v97 = vld [vmem:[#allocation8 + $0x60] sm:$0xff]
    %v98 = vld [vmem:[#allocation8 + $0x68] sm:$0xff]
    %v99 = vld [vmem:[#allocation8 + $0x70] sm:$0xff]
    %v100 = vld [vmem:[#allocation8 + $0x78] sm:$0xff]
    %v101 = vld [vmem:[#allocation8 + $0x80] sm:$0xff]
    %v102 = vld [vmem:[#allocation8 + $0x88] sm:$0xff]
    %v103 = vld [vmem:[#allocation8 + $0x90] sm:$0xff]
    %v104 = vld [vmem:[#allocation8 + $0x98] sm:$0xff]
    %v105 = vld [vmem:[#allocation8 + $0xa0] sm:$0xff]
    %v106 = vld [vmem:[#allocation8 + $0xa8] sm:$0xff]
    %v107 = vld [vmem:[#allocation8 + $0xb0] sm:$0xff]
    %v108 = vld [vmem:[#allocation8 + $0xb8] sm:$0xff]
    %v109 = vld [vmem:[#allocation8 + $0xc0] sm:$0xff]
    %v110 = vld [vmem:[#allocation8 + $0xc8] sm:$0xff]
    %v111 = vld [vmem:[#allocation8 + $0xd0] sm:$0xff]
    %v112 = vld [vmem:[#allocation8 + $0xd8] sm:$0xff]
    %v113 = vld [vmem:[#allocation8 + $0xe0] sm:$0xff]
    %v114 = vld [vmem:[#allocation8 + $0xe8] sm:$0xff]
    %v115 = vld [vmem:[#allocation8 + $0xf0] sm:$0xff]
    %v116 = vld [vmem:[#allocation8 + $0xf8] sm:$0xff]
    %v117 = vld [vmem:[%s4] sm:$0x1]
    %v119 = vlaneseq
    %v120 = vshrl.u32 %v119, 7
    %v121 = vsub.s32 0, %v120
    %v122 = vrot.slane %v117, %v121
    %124 = vmatprep.subr.mxu0 0.0
    %125 = vmatpush1.msra.mxu0 %v85
    %126 = vmatprep.subr.mxu0 0.0
    %127 = vmatpush1.msra.mxu0 %v86
    %128 = vmatprep.subr.mxu0 0.0
    %129 = vmatpush1.msra.mxu0 %v87
    %130 = vmatprep.subr.mxu0 0.0
    %131 = vmatpush1.msra.mxu0 %v88
    %132 = vmatprep.subr.mxu0 0.0
    %133 = vmatpush1.msra.mxu0 %v89
    %134 = vmatprep.subr.mxu0 0.0
    %135 = vmatpush1.msra.mxu0 %v90
    %136 = vmatprep.subr.mxu0 0.0
    %137 = vmatpush1.msra.mxu0 %v91
    %138 = vmatprep.subr.mxu0 0.0
    %139 = vmatpush1.msra.mxu0 %v92
    %140 = vmatprep.subr.mxu0 0.0
    %141 = vmatpush1.msra.mxu0 %v93
    %142 = vmatprep.subr.mxu0 0.0
    %143 = vmatpush1.msra.mxu0 %v94
    %144 = vmatprep.subr.mxu0 0.0
    %145 = vmatpush1.msra.mxu0 %v95
    %146 = vmatprep.subr.mxu0 0.0
    %147 = vmatpush1.msra.mxu0 %v96
    %148 = vmatprep.subr.mxu0 0.0
    %149 = vmatpush1.msra.mxu0 %v97
    %150 = vmatprep.subr.mxu0 0.0
    %151 = vmatpush1.msra.mxu0 %v98
    %152 = vmatprep.subr.mxu0 0.0
    %153 = vmatpush1.msra.mxu0 %v99
    %154 = vmatprep.subr.mxu0 0.0
    %155 = vmatpush1.msra.mxu0 %v100
    %156 = vmatprep.subr.mxu0 0.0
    %157 = vmatpush1.msra.mxu0 %v101
    %158 = vmatprep.subr.mxu0 0.0
    %159 = vmatpush1.msra.mxu0 %v102
    %160 = vmatprep.subr.mxu0 0.0
    %161 = vmatpush1.msra.mxu0 %v103
    %162 = vmatprep.subr.mxu0 0.0
    %163 = vmatpush1.msra.mxu0 %v104
    %164 = vmatprep.subr.mxu0 0.0
    %165 = vmatpush1.msra.mxu0 %v105
    %166 = vmatprep.subr.mxu0 0.0
    %167 = vmatpush1.msra.mxu0 %v106
    %168 = vmatprep.subr.mxu0 0.0
    %169 = vmatpush1.msra.mxu0 %v107
    %170 = vmatprep.subr.mxu0 0.0
    %171 = vmatpush1.msra.mxu0 %v108
    %172 = vmatprep.subr.mxu0 0.0
    %173 = vmatpush1.msra.mxu0 %v109
    %174 = vmatprep.subr.mxu0 0.0
    %175 = vmatpush1.msra.mxu0 %v110
    %176 = vmatprep.subr.mxu0 0.0
    %177 = vmatpush1.msra.mxu0 %v111
    %178 = vmatprep.subr.mxu0 0.0
    %179 = vmatpush1.msra.mxu0 %v112
    %180 = vmatprep.subr.mxu0 0.0
    %181 = vmatpush1.msra.mxu0 %v113
    %182 = vmatprep.subr.mxu0 0.0
    %183 = vmatpush1.msra.mxu0 %v114
    %184 = vmatprep.subr.mxu0 0.0
    %185 = vmatpush1.msra.mxu0 %v115
    %186 = vmatprep.subr.mxu0 0.0
    %187 = vmatpush1.msra.mxu0 %v116
    %188 = vmatprep.mubr.f32.mxu0 %v84
    %189 = vmatmul.mubr.f32.gmra.mrb[0].mxu0 %v83
    %v190 = vpop.f32.mrb[0].mxu0
    %v191 = vadd.f32 %v122, %v190
    %v192 = vpop.f32.mrb[0].mxu0
    %193 = vdwg.mxu0
    %v194 = vld [vmem:[#allocation10] sm:$0xff]
    %v195 = vld [vmem:[#allocation10 + $0x8] sm:$0xff]
    %v196 = vld [vmem:[#allocation10 + $0x10] sm:$0xff]
    %v197 = vld [vmem:[#allocation10 + $0x18] sm:$0xff]
    %v198 = vld [vmem:[#allocation10 + $0x20] sm:$0xff]
    %v199 = vld [vmem:[#allocation10 + $0x28] sm:$0xff]
    %v200 = vld [vmem:[#allocation10 + $0x30] sm:$0xff]
    %v201 = vld [vmem:[#allocation10 + $0x38] sm:$0xff]
    %v202 = vld [vmem:[#allocation10 + $0x40] sm:$0xff]
    %v203 = vld [vmem:[#allocation10 + $0x48] sm:$0xff]
    %v204 = vld [vmem:[#allocation10 + $0x50] sm:$0xff]
    %v205 = vld [vmem:[#allocation10 + $0x58] sm:$0xff]
    %v206 = vld [vmem:[#allocation10 + $0x60] sm:$0xff]
    %v207 = vld [vmem:[#allocation10 + $0x68] sm:$0xff]
    %v208 = vld [vmem:[#allocation10 + $0x70] sm:$0xff]
    %v209 = vld [vmem:[#allocation10 + $0x78] sm:$0xff]
    %v210 = vld [vmem:[%s7] sm:$0x1]
    %s211 = sld [smem:[#allocation3]]
    %p212 = scmp.gt.s32.totalorder %s211, 0
    // Predicated region
    $region50: #{_forward.1} parent=1 // pred_check
      %p213 = pneg %p212
    $region51: #{_forward.1} parent=1 // pred_check_branch
      %215 = sbr.rel (%p213) target = $region53
    $region52: #{_forward.1} parent=1 // pred_region
      %216 = vmatprep.subr.mxu0 0.0
      %217 = vmatpush1.msra.mxu0 %v194
      %218 = vmatprep.subr.mxu0 0.0
      %219 = vmatpush1.msra.mxu0 %v195
      %220 = vmatprep.subr.mxu0 0.0
      %221 = vmatpush1.msra.mxu0 %v196
      %222 = vmatprep.subr.mxu0 0.0
      %223 = vmatpush1.msra.mxu0 %v197
      %224 = vmatprep.subr.mxu0 0.0
      %225 = vmatpush1.msra.mxu0 %v198
      %226 = vmatprep.subr.mxu0 0.0
      %227 = vmatpush1.msra.mxu0 %v199
      %228 = vmatprep.subr.mxu0 0.0
      %229 = vmatpush1.msra.mxu0 %v200
      %230 = vmatprep.subr.mxu0 0.0
      %231 = vmatpush1.msra.mxu0 %v201
      %232 = vmatprep.subr.mxu0 0.0
      %233 = vmatpush1.msra.mxu0 %v202
      %234 = vmatprep.subr.mxu0 0.0
      %235 = vmatpush1.msra.mxu0 %v203
      %236 = vmatprep.subr.mxu0 0.0
      %237 = vmatpush1.msra.mxu0 %v204
      %238 = vmatprep.subr.mxu0 0.0
      %239 = vmatpush1.msra.mxu0 %v205
      %240 = vmatprep.subr.mxu0 0.0
      %241 = vmatpush1.msra.mxu0 %v206
      %242 = vmatprep.subr.mxu0 0.0
      %243 = vmatpush1.msra.mxu0 %v207
      %244 = vmatprep.subr.mxu0 0.0
      %245 = vmatpush1.msra.mxu0 %v208
      %246 = vmatprep.subr.mxu0 0.0
      %247 = vmatpush1.msra.mxu0 %v209
      %248 = vmatprep.subr.mxu0 0.0
      %249 = vmatpush1.msra.mxu0 0.0
      %250 = vmatprep.subr.mxu0 0.0
      %251 = vmatpush1.msra.mxu0 0.0
      %252 = vmatprep.subr.mxu0 0.0
      %253 = vmatpush1.msra.mxu0 0.0
      %254 = vmatprep.subr.mxu0 0.0
      %255 = vmatpush1.msra.mxu0 0.0
      %256 = vmatprep.subr.mxu0 0.0
      %257 = vmatpush1.msra.mxu0 0.0
      %258 = vmatprep.subr.mxu0 0.0
      %259 = vmatpush1.msra.mxu0 0.0
      %260 = vmatprep.subr.mxu0 0.0
      %261 = vmatpush1.msra.mxu0 0.0
      %262 = vmatprep.subr.mxu0 0.0
      %263 = vmatpush1.msra.mxu0 0.0
      %264 = vmatprep.subr.mxu0 0.0
      %265 = vmatpush1.msra.mxu0 0.0
      %266 = vmatprep.subr.mxu0 0.0
      %267 = vmatpush1.msra.mxu0 0.0
      %268 = vmatprep.subr.mxu0 0.0
      %269 = vmatpush1.msra.mxu0 0.0
      %270 = vmatprep.subr.mxu0 0.0
      %271 = vmatpush1.msra.mxu0 0.0
      %272 = vmatprep.subr.mxu0 0.0
      %273 = vmatpush1.msra.mxu0 0.0
      %274 = vmatprep.subr.mxu0 0.0
      %275 = vmatpush1.msra.mxu0 0.0
      %276 = vmatprep.subr.mxu0 0.0
      %277 = vmatpush1.msra.mxu0 0.0
      %278 = vmatprep.subr.mxu0 0.0
      %279 = vmatpush1.msra.mxu0 0.0
      %280 = vmatprep.mubr.f32.mxu0 0.0
      %281 = vmatmul.mubr.f32.gmra.mrb[0].mxu0 %v210
      %v282 = vpop.f32.mrb[0].mxu0
      %v283 = vadd.f32 %v191, %v282
      %v284 = vpop.f32.mrb[0].mxu0
      %285 = vdwg.mxu0
      %v286 = vtanh.pop %v283
    $region53: #{_forward.1} parent=1 // pred_fallthru
      %v287 = vphi 0, %v286
    %p288 = pneg %p212
    // Predicated region
    $region54: #{_forward.1} parent=1 // pred_check
      _
    $region55: #{_forward.1} parent=1 // pred_check_branch
      %290 = sbr.rel (%p212) target = $region57
    $region56: #{_forward.1} parent=1 // pred_region
      _
    $region57: #{_forward.1} parent=1 // pred_fallthru
      %v291 = vphi %v287, %v210
    %s292 = sld [smem:[#allocation3 + $0x1]]
    %p293 = scmp.gt.s32.totalorder %s292, 0
    // Predicated region
    $region58: #{_forward.1} parent=1 // pred_check
      %p294 = pneg %p293
    $region59: #{_forward.1} parent=1 // pred_check_branch
      %296 = sbr.rel (%p294) target = $region61
    $region60: #{_forward.1} parent=1 // pred_region
      %v298 = vrot.slane %v191, 1
      %300 = vmatprep.subr.mxu0 0.0
      %301 = vmatpush1.msra.mxu0 %v194
      %302 = vmatprep.subr.mxu0 0.0
      %303 = vmatpush1.msra.mxu0 %v195
      %304 = vmatprep.subr.mxu0 0.0
      %305 = vmatpush1.msra.mxu0 %v196
      %306 = vmatprep.subr.mxu0 0.0
      %307 = vmatpush1.msra.mxu0 %v197
      %308 = vmatprep.subr.mxu0 0.0
      %309 = vmatpush1.msra.mxu0 %v198
      %310 = vmatprep.subr.mxu0 0.0
      %311 = vmatpush1.msra.mxu0 %v199
      %312 = vmatprep.subr.mxu0 0.0
      %313 = vmatpush1.msra.mxu0 %v200
      %314 = vmatprep.subr.mxu0 0.0
      %315 = vmatpush1.msra.mxu0 %v201
      %316 = vmatprep.subr.mxu0 0.0
      %317 = vmatpush1.msra.mxu0 %v202
      %318 = vmatprep.subr.mxu0 0.0
      %319 = vmatpush1.msra.mxu0 %v203
      %320 = vmatprep.subr.mxu0 0.0
      %321 = vmatpush1.msra.mxu0 %v204
      %322 = vmatprep.subr.mxu0 0.0
      %323 = vmatpush1.msra.mxu0 %v205
      %324 = vmatprep.subr.mxu0 0.0
      %325 = vmatpush1.msra.mxu0 %v206
      %326 = vmatprep.subr.mxu0 0.0
      %327 = vmatpush1.msra.mxu0 %v207
      %328 = vmatprep.subr.mxu0 0.0
      %329 = vmatpush1.msra.mxu0 %v208
      %330 = vmatprep.subr.mxu0 0.0
      %331 = vmatpush1.msra.mxu0 %v209
      %332 = vmatprep.subr.mxu0 0.0
      %333 = vmatpush1.msra.mxu0 0.0
      %334 = vmatprep.subr.mxu0 0.0
      %335 = vmatpush1.msra.mxu0 0.0
      %336 = vmatprep.subr.mxu0 0.0
      %337 = vmatpush1.msra.mxu0 0.0
      %338 = vmatprep.subr.mxu0 0.0
      %339 = vmatpush1.msra.mxu0 0.0
      %340 = vmatprep.subr.mxu0 0.0
      %341 = vmatpush1.msra.mxu0 0.0
      %342 = vmatprep.subr.mxu0 0.0
      %343 = vmatpush1.msra.mxu0 0.0
      %344 = vmatprep.subr.mxu0 0.0
      %345 = vmatpush1.msra.mxu0 0.0
      %346 = vmatprep.subr.mxu0 0.0
      %347 = vmatpush1.msra.mxu0 0.0
      %348 = vmatprep.subr.mxu0 0.0
      %349 = vmatpush1.msra.mxu0 0.0
      %350 = vmatprep.subr.mxu0 0.0
      %351 = vmatpush1.msra.mxu0 0.0
      %352 = vmatprep.subr.mxu0 0.0
      %353 = vmatpush1.msra.mxu0 0.0
      %354 = vmatprep.subr.mxu0 0.0
      %355 = vmatpush1.msra.mxu0 0.0
      %356 = vmatprep.subr.mxu0 0.0
      %357 = vmatpush1.msra.mxu0 0.0
      %358 = vmatprep.subr.mxu0 0.0
      %359 = vmatpush1.msra.mxu0 0.0
      %360 = vmatprep.subr.mxu0 0.0
      %361 = vmatpush1.msra.mxu0 0.0
      %362 = vmatprep.subr.mxu0 0.0
      %363 = vmatpush1.msra.mxu0 0.0
      %364 = vmatprep.mubr.f32.mxu0 0.0
      %365 = vmatmul.mubr.f32.gmra.mrb[0].mxu0 %v291
      %v366 = vpop.f32.mrb[0].mxu0
      %v367 = vadd.f32 %v298, %v366
      %v368 = vpop.f32.mrb[0].mxu0
      %369 = vdwg.mxu0
      %v370 = vtanh.pop %v367
    $region61: #{_forward.1} parent=1 // pred_fallthru
      %v371 = vphi 0, %v370
    %p372 = pneg %p293
    // Predicated region
    $region62: #{_forward.1} parent=1 // pred_check
      _
    $region63: #{_forward.1} parent=1 // pred_check_branch
      %374 = sbr.rel (%p293) target = $region65
    $region64: #{_forward.1} parent=1 // pred_region
      _
    $region65: #{_forward.1} parent=1 // pred_fallthru
      %v375 = vphi %v371, %v291
    %s376 = sld [smem:[#allocation3 + $0x2]]
    %p377 = scmp.gt.s32.totalorder %s376, 0
    // Predicated region
    $region66: #{_forward.1} parent=1 // pred_check
      %p378 = pneg %p377
    $region67: #{_forward.1} parent=1 // pred_check_branch
      %380 = sbr.rel (%p378) target = $region69
    $region68: #{_forward.1} parent=1 // pred_region
      %v382 = vrot.slane %v191, 2
      %384 = vmatprep.subr.mxu0 0.0
      %385 = vmatpush1.msra.mxu0 %v194
      %386 = vmatprep.subr.mxu0 0.0
      %387 = vmatpush1.msra.mxu0 %v195
      %388 = vmatprep.subr.mxu0 0.0
      %389 = vmatpush1.msra.mxu0 %v196
      %390 = vmatprep.subr.mxu0 0.0
      %391 = vmatpush1.msra.mxu0 %v197
      %392 = vmatprep.subr.mxu0 0.0
      %393 = vmatpush1.msra.mxu0 %v198
      %394 = vmatprep.subr.mxu0 0.0
      %395 = vmatpush1.msra.mxu0 %v199
      %396 = vmatprep.subr.mxu0 0.0
      %397 = vmatpush1.msra.mxu0 %v200
      %398 = vmatprep.subr.mxu0 0.0
      %399 = vmatpush1.msra.mxu0 %v201
      %400 = vmatprep.subr.mxu0 0.0
      %401 = vmatpush1.msra.mxu0 %v202
      %402 = vmatprep.subr.mxu0 0.0
      %403 = vmatpush1.msra.mxu0 %v203
      %404 = vmatprep.subr.mxu0 0.0
      %405 = vmatpush1.msra.mxu0 %v204
      %406 = vmatprep.subr.mxu0 0.0
      %407 = vmatpush1.msra.mxu0 %v205
      %408 = vmatprep.subr.mxu0 0.0
      %409 = vmatpush1.msra.mxu0 %v206
      %410 = vmatprep.subr.mxu0 0.0
      %411 = vmatpush1.msra.mxu0 %v207
      %412 = vmatprep.subr.mxu0 0.0
      %413 = vmatpush1.msra.mxu0 %v208
      %414 = vmatprep.subr.mxu0 0.0
      %415 = vmatpush1.msra.mxu0 %v209
      %416 = vmatprep.subr.mxu0 0.0
      %417 = vmatpush1.msra.mxu0 0.0
      %418 = vmatprep.subr.mxu0 0.0
      %419 = vmatpush1.msra.mxu0 0.0
      %420 = vmatprep.subr.mxu0 0.0
      %421 = vmatpush1.msra.mxu0 0.0
      %422 = vmatprep.subr.mxu0 0.0
      %423 = vmatpush1.msra.mxu0 0.0
      %424 = vmatprep.subr.mxu0 0.0
      %425 = vmatpush1.msra.mxu0 0.0
      %426 = vmatprep.subr.mxu0 0.0
      %427 = vmatpush1.msra.mxu0 0.0
      %428 = vmatprep.subr.mxu0 0.0
      %429 = vmatpush1.msra.mxu0 0.0
      %430 = vmatprep.subr.mxu0 0.0
      %431 = vmatpush1.msra.mxu0 0.0
      %432 = vmatprep.subr.mxu0 0.0
      %433 = vmatpush1.msra.mxu0 0.0
      %434 = vmatprep.subr.mxu0 0.0
      %435 = vmatpush1.msra.mxu0 0.0
      %436 = vmatprep.subr.mxu0 0.0
      %437 = vmatpush1.msra.mxu0 0.0
      %438 = vmatprep.subr.mxu0 0.0
      %439 = vmatpush1.msra.mxu0 0.0
      %440 = vmatprep.subr.mxu0 0.0
      %441 = vmatpush1.msra.mxu0 0.0
      %442 = vmatprep.subr.mxu0 0.0
      %443 = vmatpush1.msra.mxu0 0.0
      %444 = vmatprep.subr.mxu0 0.0
      %445 = vmatpush1.msra.mxu0 0.0
      %446 = vmatprep.subr.mxu0 0.0
      %447 = vmatpush1.msra.mxu0 0.0
      %448 = vmatprep.mubr.f32.mxu0 0.0
      %449 = vmatmul.mubr.f32.gmra.mrb[0].mxu0 %v375
      %v450 = vpop.f32.mrb[0].mxu0
      %v451 = vadd.f32 %v382, %v450
      %v452 = vpop.f32.mrb[0].mxu0
      %453 = vdwg.mxu0
      %v454 = vtanh.pop %v451
    $region69: #{_forward.1} parent=1 // pred_fallthru
      %v455 = vphi 0, %v454
    %p456 = pneg %p377
    // Predicated region
    $region70: #{_forward.1} parent=1 // pred_check
      _
    $region71: #{_forward.1} parent=1 // pred_check_branch
      %458 = sbr.rel (%p377) target = $region73
    $region72: #{_forward.1} parent=1 // pred_region
      _
    $region73: #{_forward.1} parent=1 // pred_fallthru
      %v459 = vphi %v455, %v375
    %s460 = sld [smem:[#allocation3 + $0x3]]
    %p461 = scmp.gt.s32.totalorder %s460, 0
    // Predicated region
    $region74: #{_forward.1} parent=1 // pred_check
      %p462 = pneg %p461
    $region75: #{_forward.1} parent=1 // pred_check_branch
      %464 = sbr.rel (%p462) target = $region77
    $region76: #{_forward.1} parent=1 // pred_region
      %v466 = vrot.slane %v191, 3
      %468 = vmatprep.subr.mxu0 0.0
      %469 = vmatpush1.msra.mxu0 %v194
      %470 = vmatprep.subr.mxu0 0.0
      %471 = vmatpush1.msra.mxu0 %v195
      %472 = vmatprep.subr.mxu0 0.0
      %473 = vmatpush1.msra.mxu0 %v196
      %474 = vmatprep.subr.mxu0 0.0
      %475 = vmatpush1.msra.mxu0 %v197
      %476 = vmatprep.subr.mxu0 0.0
      %477 = vmatpush1.msra.mxu0 %v198
      %478 = vmatprep.subr.mxu0 0.0
      %479 = vmatpush1.msra.mxu0 %v199
      %480 = vmatprep.subr.mxu0 0.0
      %481 = vmatpush1.msra.mxu0 %v200
      %482 = vmatprep.subr.mxu0 0.0
      %483 = vmatpush1.msra.mxu0 %v201
      %484 = vmatprep.subr.mxu0 0.0
      %485 = vmatpush1.msra.mxu0 %v202
      %486 = vmatprep.subr.mxu0 0.0
      %487 = vmatpush1.msra.mxu0 %v203
      %488 = vmatprep.subr.mxu0 0.0
      %489 = vmatpush1.msra.mxu0 %v204
      %490 = vmatprep.subr.mxu0 0.0
      %491 = vmatpush1.msra.mxu0 %v205
      %492 = vmatprep.subr.mxu0 0.0
      %493 = vmatpush1.msra.mxu0 %v206
      %494 = vmatprep.subr.mxu0 0.0
      %495 = vmatpush1.msra.mxu0 %v207
      %496 = vmatprep.subr.mxu0 0.0
      %497 = vmatpush1.msra.mxu0 %v208
      %498 = vmatprep.subr.mxu0 0.0
      %499 = vmatpush1.msra.mxu0 %v209
      %500 = vmatprep.subr.mxu0 0.0
      %501 = vmatpush1.msra.mxu0 0.0
      %502 = vmatprep.subr.mxu0 0.0
      %503 = vmatpush1.msra.mxu0 0.0
      %504 = vmatprep.subr.mxu0 0.0
      %505 = vmatpush1.msra.mxu0 0.0
      %506 = vmatprep.subr.mxu0 0.0
      %507 = vmatpush1.msra.mxu0 0.0
      %508 = vmatprep.subr.mxu0 0.0
      %509 = vmatpush1.msra.mxu0 0.0
      %510 = vmatprep.subr.mxu0 0.0
      %511 = vmatpush1.msra.mxu0 0.0
      %512 = vmatprep.subr.mxu0 0.0
      %513 = vmatpush1.msra.mxu0 0.0
      %514 = vmatprep.subr.mxu0 0.0
      %515 = vmatpush1.msra.mxu0 0.0
      %516 = vmatprep.subr.mxu0 0.0
      %517 = vmatpush1.msra.mxu0 0.0
      %518 = vmatprep.subr.mxu0 0.0
      %519 = vmatpush1.msra.mxu0 0.0
      %520 = vmatprep.subr.mxu0 0.0
      %521 = vmatpush1.msra.mxu0 0.0
      %522 = vmatprep.subr.mxu0 0.0
      %523 = vmatpush1.msra.mxu0 0.0
      %524 = vmatprep.subr.mxu0 0.0
      %525 = vmatpush1.msra.mxu0 0.0
      %526 = vmatprep.subr.mxu0 0.0
      %527 = vmatpush1.msra.mxu0 0.0
      %528 = vmatprep.subr.mxu0 0.0
      %529 = vmatpush1.msra.mxu0 0.0
      %530 = vmatprep.subr.mxu0 0.0
      %531 = vmatpush1.msra.mxu0 0.0
      %532 = vmatprep.mubr.f32.mxu0 0.0
      %533 = vmatmul.mubr.f32.gmra.mrb[0].mxu0 %v459
      %v534 = vpop.f32.mrb[0].mxu0
      %v535 = vadd.f32 %v466, %v534
      %v536 = vpop.f32.mrb[0].mxu0
      %537 = vdwg.mxu0
      %v538 = vtanh.pop %v535
    $region77: #{_forward.1} parent=1 // pred_fallthru
      %v539 = vphi 0, %v538
    %p540 = pneg %p461
    // Predicated region
    $region78: #{_forward.1} parent=1 // pred_check
      _
    $region79: #{_forward.1} parent=1 // pred_check_branch
      %542 = sbr.rel (%p461) target = $region81
    $region80: #{_forward.1} parent=1 // pred_region
      _
    $region81: #{_forward.1} parent=1 // pred_fallthru
      %v543 = vphi %v539, %v459
    %s544 = sld [smem:[#allocation3 + $0x4]]
    %p545 = scmp.gt.s32.totalorder %s544, 0
    // Predicated region
    $region82: #{_forward.1} parent=1 // pred_check
      %p546 = pneg %p545
    $region83: #{_forward.1} parent=1 // pred_check_branch
      %548 = sbr.rel (%p546) target = $region85
    $region84: #{_forward.1} parent=1 // pred_region
      %v550 = vrot.slane %v191, 4
      %552 = vmatprep.subr.mxu0 0.0
      %553 = vmatpush1.msra.mxu0 %v194
      %554 = vmatprep.subr.mxu0 0.0
      %555 = vmatpush1.msra.mxu0 %v195
      %556 = vmatprep.subr.mxu0 0.0
      %557 = vmatpush1.msra.mxu0 %v196
      %558 = vmatprep.subr.mxu0 0.0
      %559 = vmatpush1.msra.mxu0 %v197
      %560 = vmatprep.subr.mxu0 0.0
      %561 = vmatpush1.msra.mxu0 %v198
      %562 = vmatprep.subr.mxu0 0.0
      %563 = vmatpush1.msra.mxu0 %v199
      %564 = vmatprep.subr.mxu0 0.0
      %565 = vmatpush1.msra.mxu0 %v200
      %566 = vmatprep.subr.mxu0 0.0
      %567 = vmatpush1.msra.mxu0 %v201
      %568 = vmatprep.subr.mxu0 0.0
      %569 = vmatpush1.msra.mxu0 %v202
      %570 = vmatprep.subr.mxu0 0.0
      %571 = vmatpush1.msra.mxu0 %v203
      %572 = vmatprep.subr.mxu0 0.0
      %573 = vmatpush1.msra.mxu0 %v204
      %574 = vmatprep.subr.mxu0 0.0
      %575 = vmatpush1.msra.mxu0 %v205
      %576 = vmatprep.subr.mxu0 0.0
      %577 = vmatpush1.msra.mxu0 %v206
      %578 = vmatprep.subr.mxu0 0.0
      %579 = vmatpush1.msra.mxu0 %v207
      %580 = vmatprep.subr.mxu0 0.0
      %581 = vmatpush1.msra.mxu0 %v208
      %582 = vmatprep.subr.mxu0 0.0
      %583 = vmatpush1.msra.mxu0 %v209
      %584 = vmatprep.subr.mxu0 0.0
      %585 = vmatpush1.msra.mxu0 0.0
      %586 = vmatprep.subr.mxu0 0.0
      %587 = vmatpush1.msra.mxu0 0.0
      %588 = vmatprep.subr.mxu0 0.0
      %589 = vmatpush1.msra.mxu0 0.0
      %590 = vmatprep.subr.mxu0 0.0
      %591 = vmatpush1.msra.mxu0 0.0
      %592 = vmatprep.subr.mxu0 0.0
      %593 = vmatpush1.msra.mxu0 0.0
      %594 = vmatprep.subr.mxu0 0.0
      %595 = vmatpush1.msra.mxu0 0.0
      %596 = vmatprep.subr.mxu0 0.0
      %597 = vmatpush1.msra.mxu0 0.0
      %598 = vmatprep.subr.mxu0 0.0
      %599 = vmatpush1.msra.mxu0 0.0
      %600 = vmatprep.subr.mxu0 0.0
      %601 = vmatpush1.msra.mxu0 0.0
      %602 = vmatprep.subr.mxu0 0.0
      %603 = vmatpush1.msra.mxu0 0.0
      %604 = vmatprep.subr.mxu0 0.0
      %605 = vmatpush1.msra.mxu0 0.0
      %606 = vmatprep.subr.mxu0 0.0
      %607 = vmatpush1.msra.mxu0 0.0
      %608 = vmatprep.subr.mxu0 0.0
      %609 = vmatpush1.msra.mxu0 0.0
      %610 = vmatprep.subr.mxu0 0.0
      %611 = vmatpush1.msra.mxu0 0.0
      %612 = vmatprep.subr.mxu0 0.0
      %613 = vmatpush1.msra.mxu0 0.0
      %614 = vmatprep.subr.mxu0 0.0
      %615 = vmatpush1.msra.mxu0 0.0
      %616 = vmatprep.mubr.f32.mxu0 0.0
      %617 = vmatmul.mubr.f32.gmra.mrb[0].mxu0 %v543
      %v618 = vpop.f32.mrb[0].mxu0
      %v619 = vadd.f32 %v550, %v618
      %v620 = vpop.f32.mrb[0].mxu0
      %621 = vdwg.mxu0
      %v622 = vtanh.pop %v619
    $region85: #{_forward.1} parent=1 // pred_fallthru
      %v623 = vphi 0, %v622
    %p624 = pneg %p545
    // Predicated region
    $region86: #{_forward.1} parent=1 // pred_check
      _
    $region87: #{_forward.1} parent=1 // pred_check_branch
      %626 = sbr.rel (%p545) target = $region89
    $region88: #{_forward.1} parent=1 // pred_region
      _
    $region89: #{_forward.1} parent=1 // pred_fallthru
      %v627 = vphi %v623, %v543
    %s628 = sld [smem:[#allocation3 + $0x5]]
    %p629 = scmp.gt.s32.totalorder %s628, 0
    // Predicated region
    $region90: #{_forward.1} parent=1 // pred_check
      %p630 = pneg %p629
    $region91: #{_forward.1} parent=1 // pred_check_branch
      %632 = sbr.rel (%p630) target = $region93
    $region92: #{_forward.1} parent=1 // pred_region
      %v634 = vrot.slane %v191, 5
      %636 = vmatprep.subr.mxu0 0.0
      %637 = vmatpush1.msra.mxu0 %v194
      %638 = vmatprep.subr.mxu0 0.0
      %639 = vmatpush1.msra.mxu0 %v195
      %640 = vmatprep.subr.mxu0 0.0
      %641 = vmatpush1.msra.mxu0 %v196
      %642 = vmatprep.subr.mxu0 0.0
      %643 = vmatpush1.msra.mxu0 %v197
      %644 = vmatprep.subr.mxu0 0.0
      %645 = vmatpush1.msra.mxu0 %v198
      %646 = vmatprep.subr.mxu0 0.0
      %647 = vmatpush1.msra.mxu0 %v199
      %648 = vmatprep.subr.mxu0 0.0
      %649 = vmatpush1.msra.mxu0 %v200
      %650 = vmatprep.subr.mxu0 0.0
      %651 = vmatpush1.msra.mxu0 %v201
      %652 = vmatprep.subr.mxu0 0.0
      %653 = vmatpush1.msra.mxu0 %v202
      %654 = vmatprep.subr.mxu0 0.0
      %655 = vmatpush1.msra.mxu0 %v203
      %656 = vmatprep.subr.mxu0 0.0
      %657 = vmatpush1.msra.mxu0 %v204
      %658 = vmatprep.subr.mxu0 0.0
      %659 = vmatpush1.msra.mxu0 %v205
      %660 = vmatprep.subr.mxu0 0.0
      %661 = vmatpush1.msra.mxu0 %v206
      %662 = vmatprep.subr.mxu0 0.0
      %663 = vmatpush1.msra.mxu0 %v207
      %664 = vmatprep.subr.mxu0 0.0
      %665 = vmatpush1.msra.mxu0 %v208
      %666 = vmatprep.subr.mxu0 0.0
      %667 = vmatpush1.msra.mxu0 %v209
      %668 = vmatprep.subr.mxu0 0.0
      %669 = vmatpush1.msra.mxu0 0.0
      %670 = vmatprep.subr.mxu0 0.0
      %671 = vmatpush1.msra.mxu0 0.0
      %672 = vmatprep.subr.mxu0 0.0
      %673 = vmatpush1.msra.mxu0 0.0
      %674 = vmatprep.subr.mxu0 0.0
      %675 = vmatpush1.msra.mxu0 0.0
      %676 = vmatprep.subr.mxu0 0.0
      %677 = vmatpush1.msra.mxu0 0.0
      %678 = vmatprep.subr.mxu0 0.0
      %679 = vmatpush1.msra.mxu0 0.0
      %680 = vmatprep.subr.mxu0 0.0
      %681 = vmatpush1.msra.mxu0 0.0
      %682 = vmatprep.subr.mxu0 0.0
      %683 = vmatpush1.msra.mxu0 0.0
      %684 = vmatprep.subr.mxu0 0.0
      %685 = vmatpush1.msra.mxu0 0.0
      %686 = vmatprep.subr.mxu0 0.0
      %687 = vmatpush1.msra.mxu0 0.0
      %688 = vmatprep.subr.mxu0 0.0
      %689 = vmatpush1.msra.mxu0 0.0
      %690 = vmatprep.subr.mxu0 0.0
      %691 = vmatpush1.msra.mxu0 0.0
      %692 = vmatprep.subr.mxu0 0.0
      %693 = vmatpush1.msra.mxu0 0.0
      %694 = vmatprep.subr.mxu0 0.0
      %695 = vmatpush1.msra.mxu0 0.0
      %696 = vmatprep.subr.mxu0 0.0
      %697 = vmatpush1.msra.mxu0 0.0
      %698 = vmatprep.subr.mxu0 0.0
      %699 = vmatpush1.msra.mxu0 0.0
      %700 = vmatprep.mubr.f32.mxu0 0.0
      %701 = vmatmul.mubr.f32.gmra.mrb[0].mxu0 %v627
      %v702 = vpop.f32.mrb[0].mxu0
      %v703 = vadd.f32 %v634, %v702
      %v704 = vpop.f32.mrb[0].mxu0
      %705 = vdwg.mxu0
      %v706 = vtanh.pop %v703
    $region93: #{_forward.1} parent=1 // pred_fallthru
      %v707 = vphi 0, %v706
    %p708 = pneg %p629
    // Predicated region
    $region94: #{_forward.1} parent=1 // pred_check
      _
    $region95: #{_forward.1} parent=1 // pred_check_branch
      %710 = sbr.rel (%p629) target = $region97
    $region96: #{_forward.1} parent=1 // pred_region
      _
    $region97: #{_forward.1} parent=1 // pred_fallthru
      %v711 = vphi %v707, %v627
    %s712 = sld [smem:[#allocation3 + $0x6]]
    %p713 = scmp.gt.s32.totalorder %s712, 0
    // Predicated region
    $region98: #{_forward.1} parent=1 // pred_check
      %p714 = pneg %p713
    $region99: #{_forward.1} parent=1 // pred_check_branch
      %716 = sbr.rel (%p714) target = $region101
    $region100: #{_forward.1} parent=1 // pred_region
      %v718 = vrot.slane %v191, 6
      %720 = vmatprep.subr.mxu0 0.0
      %721 = vmatpush1.msra.mxu0 %v194
      %722 = vmatprep.subr.mxu0 0.0
      %723 = vmatpush1.msra.mxu0 %v195
      %724 = vmatprep.subr.mxu0 0.0
      %725 = vmatpush1.msra.mxu0 %v196
      %726 = vmatprep.subr.mxu0 0.0
      %727 = vmatpush1.msra.mxu0 %v197
      %728 = vmatprep.subr.mxu0 0.0
      %729 = vmatpush1.msra.mxu0 %v198
      %730 = vmatprep.subr.mxu0 0.0
      %731 = vmatpush1.msra.mxu0 %v199
      %732 = vmatprep.subr.mxu0 0.0
      %733 = vmatpush1.msra.mxu0 %v200
      %734 = vmatprep.subr.mxu0 0.0
      %735 = vmatpush1.msra.mxu0 %v201
      %736 = vmatprep.subr.mxu0 0.0
      %737 = vmatpush1.msra.mxu0 %v202
      %738 = vmatprep.subr.mxu0 0.0
      %739 = vmatpush1.msra.mxu0 %v203
      %740 = vmatprep.subr.mxu0 0.0
      %741 = vmatpush1.msra.mxu0 %v204
      %742 = vmatprep.subr.mxu0 0.0
      %743 = vmatpush1.msra.mxu0 %v205
      %744 = vmatprep.subr.mxu0 0.0
      %745 = vmatpush1.msra.mxu0 %v206
      %746 = vmatprep.subr.mxu0 0.0
      %747 = vmatpush1.msra.mxu0 %v207
      %748 = vmatprep.subr.mxu0 0.0
      %749 = vmatpush1.msra.mxu0 %v208
      %750 = vmatprep.subr.mxu0 0.0
      %751 = vmatpush1.msra.mxu0 %v209
      %752 = vmatprep.subr.mxu0 0.0
      %753 = vmatpush1.msra.mxu0 0.0
      %754 = vmatprep.subr.mxu0 0.0
      %755 = vmatpush1.msra.mxu0 0.0
      %756 = vmatprep.subr.mxu0 0.0
      %757 = vmatpush1.msra.mxu0 0.0
      %758 = vmatprep.subr.mxu0 0.0
      %759 = vmatpush1.msra.mxu0 0.0
      %760 = vmatprep.subr.mxu0 0.0
      %761 = vmatpush1.msra.mxu0 0.0
      %762 = vmatprep.subr.mxu0 0.0
      %763 = vmatpush1.msra.mxu0 0.0
      %764 = vmatprep.subr.mxu0 0.0
      %765 = vmatpush1.msra.mxu0 0.0
      %766 = vmatprep.subr.mxu0 0.0
      %767 = vmatpush1.msra.mxu0 0.0
      %768 = vmatprep.subr.mxu0 0.0
      %769 = vmatpush1.msra.mxu0 0.0
      %770 = vmatprep.subr.mxu0 0.0
      %771 = vmatpush1.msra.mxu0 0.0
      %772 = vmatprep.subr.mxu0 0.0
      %773 = vmatpush1.msra.mxu0 0.0
      %774 = vmatprep.subr.mxu0 0.0
      %775 = vmatpush1.msra.mxu0 0.0
      %776 = vmatprep.subr.mxu0 0.0
      %777 = vmatpush1.msra.mxu0 0.0
      %778 = vmatprep.subr.mxu0 0.0
      %779 = vmatpush1.msra.mxu0 0.0
      %780 = vmatprep.subr.mxu0 0.0
      %781 = vmatpush1.msra.mxu0 0.0
      %782 = vmatprep.subr.mxu0 0.0
      %783 = vmatpush1.msra.mxu0 0.0
      %784 = vmatprep.mubr.f32.mxu0 0.0
      %785 = vmatmul.mubr.f32.gmra.mrb[0].mxu0 %v711
      %v786 = vpop.f32.mrb[0].mxu0
      %v787 = vadd.f32 %v718, %v786
      %v788 = vpop.f32.mrb[0].mxu0
      %789 = vdwg.mxu0
      %v790 = vtanh.pop %v787
    $region101: #{_forward.1} parent=1 // pred_fallthru
      %v791 = vphi 0, %v790
    %p792 = pneg %p713
    // Predicated region
    $region102: #{_forward.1} parent=1 // pred_check
      _
    $region103: #{_forward.1} parent=1 // pred_check_branch
      %794 = sbr.rel (%p713) target = $region105
    $region104: #{_forward.1} parent=1 // pred_region
      _
    $region105: #{_forward.1} parent=1 // pred_fallthru
      %v795 = vphi %v791, %v711
    %s796 = sld [smem:[#allocation3 + $0x7]]
    %p797 = scmp.gt.s32.totalorder %s796, 0
    // Predicated region
    $region106: #{_forward.1} parent=1 // pred_check
      %p798 = pneg %p797
    $region107: #{_forward.1} parent=1 // pred_check_branch
      %800 = sbr.rel (%p798) target = $region109
    $region108: #{_forward.1} parent=1 // pred_region
      %v802 = vrot.slane %v191, 7
      %804 = vmatprep.subr.mxu0 0.0
      %805 = vmatpush1.msra.mxu0 %v194
      %806 = vmatprep.subr.mxu0 0.0
      %807 = vmatpush1.msra.mxu0 %v195
      %808 = vmatprep.subr.mxu0 0.0
      %809 = vmatpush1.msra.mxu0 %v196
      %810 = vmatprep.subr.mxu0 0.0
      %811 = vmatpush1.msra.mxu0 %v197
      %812 = vmatprep.subr.mxu0 0.0
      %813 = vmatpush1.msra.mxu0 %v198
      %814 = vmatprep.subr.mxu0 0.0
      %815 = vmatpush1.msra.mxu0 %v199
      %816 = vmatprep.subr.mxu0 0.0
      %817 = vmatpush1.msra.mxu0 %v200
      %818 = vmatprep.subr.mxu0 0.0
      %819 = vmatpush1.msra.mxu0 %v201
      %820 = vmatprep.subr.mxu0 0.0
      %821 = vmatpush1.msra.mxu0 %v202
      %822 = vmatprep.subr.mxu0 0.0
      %823 = vmatpush1.msra.mxu0 %v203
      %824 = vmatprep.subr.mxu0 0.0
      %825 = vmatpush1.msra.mxu0 %v204
      %826 = vmatprep.subr.mxu0 0.0
      %827 = vmatpush1.msra.mxu0 %v205
      %828 = vmatprep.subr.mxu0 0.0
      %829 = vmatpush1.msra.mxu0 %v206
      %830 = vmatprep.subr.mxu0 0.0
      %831 = vmatpush1.msra.mxu0 %v207
      %832 = vmatprep.subr.mxu0 0.0
      %833 = vmatpush1.msra.mxu0 %v208
      %834 = vmatprep.subr.mxu0 0.0
      %835 = vmatpush1.msra.mxu0 %v209
      %836 = vmatprep.subr.mxu0 0.0
      %837 = vmatpush1.msra.mxu0 0.0
      %838 = vmatprep.subr.mxu0 0.0
      %839 = vmatpush1.msra.mxu0 0.0
      %840 = vmatprep.subr.mxu0 0.0
      %841 = vmatpush1.msra.mxu0 0.0
      %842 = vmatprep.subr.mxu0 0.0
      %843 = vmatpush1.msra.mxu0 0.0
      %844 = vmatprep.subr.mxu0 0.0
      %845 = vmatpush1.msra.mxu0 0.0
      %846 = vmatprep.subr.mxu0 0.0
      %847 = vmatpush1.msra.mxu0 0.0
      %848 = vmatprep.subr.mxu0 0.0
      %849 = vmatpush1.msra.mxu0 0.0
      %850 = vmatprep.subr.mxu0 0.0
      %851 = vmatpush1.msra.mxu0 0.0
      %852 = vmatprep.subr.mxu0 0.0
      %853 = vmatpush1.msra.mxu0 0.0
      %854 = vmatprep.subr.mxu0 0.0
      %855 = vmatpush1.msra.mxu0 0.0
      %856 = vmatprep.subr.mxu0 0.0
      %857 = vmatpush1.msra.mxu0 0.0
      %858 = vmatprep.subr.mxu0 0.0
      %859 = vmatpush1.msra.mxu0 0.0
      %860 = vmatprep.subr.mxu0 0.0
      %861 = vmatpush1.msra.mxu0 0.0
      %862 = vmatprep.subr.mxu0 0.0
      %863 = vmatpush1.msra.mxu0 0.0
      %864 = vmatprep.subr.mxu0 0.0
      %865 = vmatpush1.msra.mxu0 0.0
      %866 = vmatprep.subr.mxu0 0.0
      %867 = vmatpush1.msra.mxu0 0.0
      %868 = vmatprep.mubr.f32.mxu0 0.0
      %869 = vmatmul.mubr.f32.gmra.mrb[0].mxu0 %v795
      %v870 = vpop.f32.mrb[0].mxu0
      %v871 = vadd.f32 %v802, %v870
      %v872 = vpop.f32.mrb[0].mxu0
      %873 = vdwg.mxu0
      %v874 = vtanh.pop %v871
    $region109: #{_forward.1} parent=1 // pred_fallthru
      %v875 = vphi 0, %v874
    %p876 = pneg %p797
    // Predicated region
    $region110: #{_forward.1} parent=1 // pred_check
      _
    $region111: #{_forward.1} parent=1 // pred_check_branch
      %878 = sbr.rel (%p797) target = $region113
    $region112: #{_forward.1} parent=1 // pred_region
      _
    $region113: #{_forward.1} parent=1 // pred_fallthru
      %v879 = vphi %v875, %v795
    %v880 = vld [vmem:[%s6] sm:$0x1]
    %v881 = vmul.f32 %v879, %v880
    %vm882 = vcmask 1040384
    %v883 = vsel %vm882, %v881, 0.0
    %884 = vadd.xlane.f32.xlu0 %v883
    %v885 = vpop.xlane.xlu0 %884
    %v886 = vrot.slane %v885, 4
    %v887 = vadd.f32 %v885, %v886
    %v888 = vrot.slane %v887, 2
    %v889 = vadd.f32 %v887, %v888
    %v890 = vrot.slane %v889, 1
    %v891 = vadd.f32 %v889, %v890
    %s892 = vtos %v891
    %s893 = sld [smem:[#allocation2]]
    %p894 = scmp.gt.s32.totalorder %s893, 0
    %s895 = scalar_select %p894, 1.0, 0.0
    %s896 = smul.f32 %s892, %s895
    %v897 = vstv %s896
    %vm898 = vcmask 0
    %899 = vst.msk [vmem:[#allocation11] sm:$0x1] %vm898, %v897
    // Predicated region
    $region114: #{_forward.1} parent=1 // pred_check
      _
    $region115: #{_forward.1} parent=1 // pred_check_branch
      %901 = sbr.rel (0) target = $region117
    $region116: #{_forward.1} parent=1 // pred_region
      %s903 = ssub.s32 16, 16
      %904 = vsyncadd [#allocation5], %s903
      %s906 = sshll.u32 [#allocation11], 4
      %s907 = int_to_ptr.vmem [resolvable:$true] %s906
      %909 = dma.vmem_to_hbm [thread:$0]  %s907, 16, %s8, [#allocation5]
    $region117: #{_forward.1} parent=1 // pred_fallthru
      _
    // Predicated region
    $region118: #{_forward.1} parent=1 // pred_check
      _
    $region119: #{_forward.1} parent=1 // pred_check_branch
      %911 = sbr.rel (0) target = $region121
    $region120: #{_forward.1} parent=1 // pred_region
      %912 = dma.done [#allocation5], 16
    $region121: #{_forward.1} parent=1 // pred_fallthru
      _
    %913 = vsyncpa [#allocation4], 1
    %914 = vsyncpa [#allocation9], 1
    %915 = vsyncpa [#allocation5], 1
    %916 = vsyncpa [#allocation6], 1

</llo_original>
